<compile_context>
chip_gen: v7x
topology: tpu7x:2x2x1
jax: 0.10.0
libtpu: 0.0.40
codegen_flags: <defaults>
</compile_context>

<pallas_src>
import jax
import jax.numpy as jnp
from jax import lax
from jax.experimental import pallas as pl
from jax.experimental.pallas import tpu as pltpu


def _resblock_kernel(x_ref, w1_ref, b1_ref, w2_ref, b2_ref, w3_ref, b3_ref,
                     o_ref, pad_ref):
    # x_ref : (1, H, W*C)  f32       w1_ref: (W*C,   W*C4) bf16 (block-diag)
    # w2_ref: (3*W*C4, W*C4) bf16 (block-banded, kh stacked along rows)
    # w3_ref: (W*C4,  W*C)  bf16 (block-diag)
    # b*_ref: (1, W*C4)/(1, W*C) f32 (lane-tiled biases)
    # pad_ref: VMEM (H+2, W*C4) f32 scratch (H halo only, lane-dense)
    H = x_ref.shape[1]
    WC4 = pad_ref.shape[1]

    x = x_ref[0]                                         # (H, W*C) f32

    # --- conv1x1 (C -> C/4) + folded BN1 + ReLU --------------------------
    h1 = jnp.dot(x.astype(jnp.bfloat16), w1_ref[...],
                 preferred_element_type=jnp.float32) + b1_ref[...]
    h1 = jnp.maximum(h1, 0.0)                            # (H, W*C4) f32

    # --- conv3x3 (stride 1, pad 1) + folded BN2 + ReLU --------------------
    # Pad along H only (full-lane-width rows); kw shifts / W padding are
    # folded into the block-banded weight.  The two border rows are re-zeroed
    # every step (2 tiny row stores) instead of once under program_id==0,
    # because the scratch is per-core under megacore grid sharding.
    zrow = jnp.zeros((1, WC4), jnp.float32)
    pad_ref[0:1, :] = zrow
    pad_ref[H + 1:H + 2, :] = zrow
    pad_ref[1:H + 1, :] = h1
    win = jnp.concatenate(
        [pad_ref[0:H, :], h1, pad_ref[2:H + 2, :]], axis=1)   # (H, 3*W*C4)
    h2 = jnp.dot(win.astype(jnp.bfloat16), w2_ref[...],
                 preferred_element_type=jnp.float32) + b2_ref[...]
    h2 = jnp.maximum(h2, 0.0)                            # (H, W*C4) f32

    # --- conv1x1 (C/4 -> C) + folded BN3, residual add, ReLU --------------
    h3 = jnp.dot(h2.astype(jnp.bfloat16), w3_ref[...],
                 preferred_element_type=jnp.float32) + b3_ref[...]
    o_ref[0] = jnp.maximum(h3 + x, 0.0)                  # lane-dense store


def _expand_weights(folded, W):
    """Build lane-folded (block-diag / block-banded) bf16 weights + tiled biases."""
    w1, b1, w2, b2, w3, b3 = folded        # math layout, f32
    eye_w = jnp.eye(W, dtype=jnp.float32)
    w1_blk = jnp.kron(eye_w, w1)           # (W*C,  W*C4)
    w3_blk = jnp.kron(eye_w, w3)           # (W*C4, W*C)
    # Block-banded 3x3 weights: B_kh[j'*C4+c, j*C4+d] = w2[kh, j'-j+1, c, d]
    rows = []
    for kh in range(3):
        bk = sum(jnp.kron(jnp.eye(W, k=1 - kw, dtype=jnp.float32), w2[kh, kw])
                 for kw in range(3))
        rows.append(bk)
    w2_blk = jnp.concatenate(rows, axis=0)  # (3*W*C4, W*C4)
    b1_t = jnp.tile(b1, (1, W))             # (1, W*C4)
    b2_t = jnp.tile(b2, (1, W))             # (1, W*C4)
    b3_t = jnp.tile(b3, (1, W))             # (1, W*C)
    return (w1_blk.astype(jnp.bfloat16), b1_t,
            w2_blk.astype(jnp.bfloat16), b2_t,
            w3_blk.astype(jnp.bfloat16), b3_t)


def residual_block_big_pallas(x_nchw, folded_params):
    """x_nchw: (N, C, H, W) float32.  Returns (N, C, H, W) float32."""
    N, C, H, W = x_nchw.shape
    assert C % 4 == 0, "channel must be divisible by 4"
    C4 = C // 4
    WC, WC4 = W * C, W * C4

    w1_blk, b1_t, w2_blk, b2_t, w3_blk, b3_t = _expand_weights(folded_params, W)

    # NCHW -> NHWC -> lane-folded (N, H, W*C): channels fastest on lane axis.
    x2d = jnp.transpose(x_nchw, (0, 2, 3, 1)).reshape(N, H, WC).astype(jnp.float32)

    out2d = pl.pallas_call(
        _resblock_kernel,
        out_shape=jax.ShapeDtypeStruct((N, H, WC), jnp.float32),
        grid_spec=pltpu.PrefetchScalarGridSpec(
            num_scalar_prefetch=0,
            grid=(N,),
            in_specs=[
                pl.BlockSpec((1, H, WC), lambda n: (n, 0, 0)),
                pl.BlockSpec((WC, WC4), lambda n: (0, 0)),
                pl.BlockSpec((1, WC4), lambda n: (0, 0)),
                pl.BlockSpec((3 * WC4, WC4), lambda n: (0, 0)),
                pl.BlockSpec((1, WC4), lambda n: (0, 0)),
                pl.BlockSpec((WC4, WC), lambda n: (0, 0)),
                pl.BlockSpec((1, WC), lambda n: (0, 0)),
            ],
            out_specs=pl.BlockSpec((1, H, WC), lambda n: (n, 0, 0)),
            scratch_shapes=[pltpu.VMEM((H + 2, WC4), jnp.float32)],
        ),
        compiler_params=pltpu.CompilerParams(
            dimension_semantics=("parallel",),
            vmem_limit_bytes=32 * 1024 * 1024),
    )(x2d, w1_blk, b1_t, w2_blk, b2_t, w3_blk, b3_t)

    return jnp.transpose(out2d.reshape(N, H, W, C), (0, 3, 1, 2))


# ----------------------------------------------------------------------------
# Parameter construction (deterministic) + BN folding + pure-JAX reference
# ----------------------------------------------------------------------------
_EPS = 1e-5


def make_params(key, channel):
    c4 = channel // 4
    ks = jax.random.split(key, 12)
    p = {
        # PyTorch conv weight layout: (out, in, kh, kw)
        "w1": jax.random.normal(ks[0], (c4, channel, 1, 1), jnp.float32) * 0.1,
        "cb1": jax.random.normal(ks[1], (c4,), jnp.float32) * 0.1,
        "w2": jax.random.normal(ks[2], (c4, c4, 3, 3), jnp.float32) * 0.1,
        "cb2": jax.random.normal(ks[3], (c4,), jnp.float32) * 0.1,
        "w3": jax.random.normal(ks[4], (channel, c4, 1, 1), jnp.float32) * 0.1,
        "cb3": jax.random.normal(ks[5], (channel,), jnp.float32) * 0.1,
    }
    for i, c in zip(range(3), (c4, c4, channel)):
        kk = jax.random.split(ks[6 + i], 4)
        p[f"g{i+1}"] = jax.random.uniform(kk[0], (c,), jnp.float32, 0.8, 1.2)
        p[f"be{i+1}"] = jax.random.normal(kk[1], (c,), jnp.float32) * 0.1
        p[f"rm{i+1}"] = jax.random.normal(kk[2], (c,), jnp.float32) * 0.1
        p[f"rv{i+1}"] = jax.random.uniform(kk[3], (c,), jnp.float32, 0.5, 1.5)
    return p


def fold_params(p):
    """Fold eval-mode BN into conv weight/bias; emit math-layout tensors."""
    def scale(i):
        return p[f"g{i}"] / jnp.sqrt(p[f"rv{i}"] + _EPS)

    s1, s2, s3 = scale(1), scale(2), scale(3)

    w1 = p["w1"][:, :, 0, 0].T * s1[None, :]                      # (C, C4)
    b1 = ((p["cb1"] - p["rm1"]) * s1 + p["be1"]).reshape(1, -1)   # (1, C4)

    w2 = jnp.transpose(p["w2"], (2, 3, 1, 0)) * s2[None, None, None, :]  # (3,3,C4,C4)
    b2 = ((p["cb2"] - p["rm2"]) * s2 + p["be2"]).reshape(1, -1)   # (1, C4)

    w3 = p["w3"][:, :, 0, 0].T * s3[None, :]                      # (C4, C)
    b3 = ((p["cb3"] - p["rm3"]) * s3 + p["be3"]).reshape(1, -1)   # (1, C)

    return (w1, b1, w2, b2, w3, b3)


def reference_forward(x, p):
    """Pure-JAX NCHW f32 reference matching the PyTorch module (eval-mode BN)."""
    dn = ("NCHW", "OIHW", "NCHW")

    def conv(x, w, b, pad):
        y = lax.conv_general_dilated(x, w, (1, 1), [(pad, pad), (pad, pad)],
                                     dimension_numbers=dn)
        return y + b.reshape(1, -1, 1, 1)

    def bn(x, i):
        g, be, rm, rv = p[f"g{i}"], p[f"be{i}"], p[f"rm{i}"], p[f"rv{i}"]
        inv = g / jnp.sqrt(rv + _EPS)
        return (x - rm.reshape(1, -1, 1, 1)) * inv.reshape(1, -1, 1, 1) \
            + be.reshape(1, -1, 1, 1)

    h = jax.nn.relu(bn(conv(x, p["w1"], p["cb1"], 0), 1))
    h = jax.nn.relu(bn(conv(h, p["w2"], p["cb2"], 1), 2))
    h = bn(conv(h, p["w3"], p["cb3"], 0), 3)
    return jax.nn.relu(h + x)


if __name__ == "__main__":
    key = jax.random.PRNGKey(0)
    k_x, k_p = jax.random.split(key)

    N, C, H, W = 2, 32, 16, 16          # channel must be divisible by 4
    x = jax.random.normal(k_x, (N, C, H, W), jnp.float32)

    params = make_params(k_p, C)
    folded = fold_params(params)

    out = jax.block_until_ready(residual_block_big_pallas(x, folded))
    ref = jax.block_until_ready(reference_forward(x, params))

    assert out.shape == (N, C, H, W)
    # Tolerance loosened vs the f32 reference because matmul inputs are bf16
    # (accumulation stays f32); structural errors would be O(0.3 - 1.0).
    err = float(jnp.max(jnp.abs(out - ref)))
    assert jnp.allclose(out, ref, atol=5e-2, rtol=5e-2), f"max err {err}"

    print("KERNEL_OK")
</pallas_src>

<mosaic_0001>
module attributes {stable_mosaic.version = 11 : i64} {
  func.func @_resblock_kernel(%arg0: i32, %arg1: memref<1x16x512xf32, #tpu.memory_space<vmem>>, %arg2: memref<512x128xbf16, #tpu.memory_space<vmem>>, %arg3: memref<1x128xf32, #tpu.memory_space<vmem>>, %arg4: memref<384x128xbf16, #tpu.memory_space<vmem>>, %arg5: memref<1x128xf32, #tpu.memory_space<vmem>>, %arg6: memref<128x512xbf16, #tpu.memory_space<vmem>>, %arg7: memref<1x512xf32, #tpu.memory_space<vmem>>, %arg8: memref<1x16x512xf32, #tpu.memory_space<vmem>>, %arg9: memref<18x128xf32, #tpu.memory_space<vmem>>) attributes {dimension_semantics = [#tpu.dimension_semantics<parallel>], iteration_bounds = array<i64: 2>, scalar_prefetch = 0 : i64, scratch_operands = 1 : i64, tpu.core_type = #tpu.core_type<tc>, window_params = [{transform_indices = @transform_0, window_bounds = array<i64: 1, 16, 512>}, {pipeline_mode = #tpu.pipeline_mode<synchronous>, transform_indices = @transform_1, window_bounds = array<i64: 512, 128>}, {pipeline_mode = #tpu.pipeline_mode<synchronous>, transform_indices = @transform_2, window_bounds = array<i64: 1, 128>}, {pipeline_mode = #tpu.pipeline_mode<synchronous>, transform_indices = @transform_3, window_bounds = array<i64: 384, 128>}, {pipeline_mode = #tpu.pipeline_mode<synchronous>, transform_indices = @transform_4, window_bounds = array<i64: 1, 128>}, {pipeline_mode = #tpu.pipeline_mode<synchronous>, transform_indices = @transform_5, window_bounds = array<i64: 128, 512>}, {pipeline_mode = #tpu.pipeline_mode<synchronous>, transform_indices = @transform_6, window_bounds = array<i64: 1, 512>}, {transform_indices = @transform_7, window_bounds = array<i64: 1, 16, 512>}]} {
    %c0 = arith.constant 0 : index
    %c0_0 = arith.constant 0 : index
    %c0_1 = arith.constant 0 : index
    %0 = vector.load %arg1[%c0, %c0_0, %c0_1] : memref<1x16x512xf32, #tpu.memory_space<vmem>>, vector<1x16x512xf32>
    %1 = vector.shape_cast %0 : vector<1x16x512xf32> to vector<16x512xf32>
    %2 = arith.truncf %1 : vector<16x512xf32> to vector<16x512xbf16>
    %c0_2 = arith.constant 0 : index
    %c0_3 = arith.constant 0 : index
    %3 = vector.load %arg2[%c0_2, %c0_3] : memref<512x128xbf16, #tpu.memory_space<vmem>>, vector<512x128xbf16>
    %cst = arith.constant dense<0.000000e+00> : vector<16x128xf32>
    %4 = tpu.matmul %2, %3, %cst {dimension_numbers = #tpu.dot_dimension_numbers<[1], [0], [0], [1], [0, 0, 1, 1], [], []>} : vector<16x512xbf16>, vector<512x128xbf16>, vector<16x128xf32> -> vector<16x128xf32>
    %c0_4 = arith.constant 0 : index
    %c0_5 = arith.constant 0 : index
    %5 = vector.load %arg3[%c0_4, %c0_5] : memref<1x128xf32, #tpu.memory_space<vmem>>, vector<1x128xf32>
    %6 = vector.broadcast %5 : vector<1x128xf32> to vector<16x128xf32>
    %7 = arith.addf %4, %6 : vector<16x128xf32>
    %cst_6 = arith.constant 0.000000e+00 : f32
    %8 = vector.broadcast %cst_6 : f32 to vector<16x128xf32>
    %9 = arith.maximumf %7, %8 : vector<16x128xf32>
    %cst_7 = arith.constant 0.000000e+00 : f32
    %10 = vector.broadcast %cst_7 : f32 to vector<1x128xf32>
    %c0_8 = arith.constant 0 : index
    %c0_9 = arith.constant 0 : index
    %11 = vector.load %arg9[%c0_8, %c0_9] : memref<18x128xf32, #tpu.memory_space<vmem>>, vector<1x128xf32>
    tpu.vector_store %arg9[%c0_8, %c0_9], %10 {strides = array<i32>} : memref<18x128xf32, #tpu.memory_space<vmem>>, vector<1x128xf32>,
    %c17 = arith.constant 17 : index
    %c0_10 = arith.constant 0 : index
    %12 = vector.load %arg9[%c17, %c0_10] : memref<18x128xf32, #tpu.memory_space<vmem>>, vector<1x128xf32>
    tpu.vector_store %arg9[%c17, %c0_10], %10 {strides = array<i32>} : memref<18x128xf32, #tpu.memory_space<vmem>>, vector<1x128xf32>,
    %c1 = arith.constant 1 : index
    %c0_11 = arith.constant 0 : index
    %13 = vector.load %arg9[%c1, %c0_11] : memref<18x128xf32, #tpu.memory_space<vmem>>, vector<16x128xf32>
    tpu.vector_store %arg9[%c1, %c0_11], %9 {strides = array<i32>} : memref<18x128xf32, #tpu.memory_space<vmem>>, vector<16x128xf32>,
    %c0_12 = arith.constant 0 : index
    %c0_13 = arith.constant 0 : index
    %14 = vector.load %arg9[%c0_12, %c0_13] : memref<18x128xf32, #tpu.memory_space<vmem>>, vector<16x128xf32>
    %c2 = arith.constant 2 : index
    %c0_14 = arith.constant 0 : index
    %15 = vector.load %arg9[%c2, %c0_14] : memref<18x128xf32, #tpu.memory_space<vmem>>, vector<16x128xf32>
    %16 = tpu.concatenate %14, %9, %15 in 1 : vector<16x128xf32>, vector<16x128xf32>, vector<16x128xf32> -> vector<16x384xf32>
    %17 = arith.truncf %16 : vector<16x384xf32> to vector<16x384xbf16>
    %c0_15 = arith.constant 0 : index
    %c0_16 = arith.constant 0 : index
    %18 = vector.load %arg4[%c0_15, %c0_16] : memref<384x128xbf16, #tpu.memory_space<vmem>>, vector<384x128xbf16>
    %cst_17 = arith.constant dense<0.000000e+00> : vector<16x128xf32>
    %19 = tpu.matmul %17, %18, %cst_17 {dimension_numbers = #tpu.dot_dimension_numbers<[1], [0], [0], [1], [0, 0, 1, 1], [], []>} : vector<16x384xbf16>, vector<384x128xbf16>, vector<16x128xf32> -> vector<16x128xf32>
    %c0_18 = arith.constant 0 : index
    %c0_19 = arith.constant 0 : index
    %20 = vector.load %arg5[%c0_18, %c0_19] : memref<1x128xf32, #tpu.memory_space<vmem>>, vector<1x128xf32>
    %21 = vector.broadcast %20 : vector<1x128xf32> to vector<16x128xf32>
    %22 = arith.addf %19, %21 : vector<16x128xf32>
    %cst_20 = arith.constant 0.000000e+00 : f32
    %23 = vector.broadcast %cst_20 : f32 to vector<16x128xf32>
    %24 = arith.maximumf %22, %23 : vector<16x128xf32>
    %25 = arith.truncf %24 : vector<16x128xf32> to vector<16x128xbf16>
    %c0_21 = arith.constant 0 : index
    %c0_22 = arith.constant 0 : index
    %26 = vector.load %arg6[%c0_21, %c0_22] : memref<128x512xbf16, #tpu.memory_space<vmem>>, vector<128x512xbf16>
    %cst_23 = arith.constant dense<0.000000e+00> : vector<16x512xf32>
    %27 = tpu.matmul %25, %26, %cst_23 {dimension_numbers = #tpu.dot_dimension_numbers<[1], [0], [0], [1], [0, 0, 1, 1], [], []>} : vector<16x128xbf16>, vector<128x512xbf16>, vector<16x512xf32> -> vector<16x512xf32>
    %c0_24 = arith.constant 0 : index
    %c0_25 = arith.constant 0 : index
    %28 = vector.load %arg7[%c0_24, %c0_25] : memref<1x512xf32, #tpu.memory_space<vmem>>, vector<1x512xf32>
    %29 = vector.broadcast %28 : vector<1x512xf32> to vector<16x512xf32>
    %30 = arith.addf %27, %29 : vector<16x512xf32>
    %31 = arith.addf %30, %1 : vector<16x512xf32>
    %cst_26 = arith.constant 0.000000e+00 : f32
    %32 = vector.broadcast %cst_26 : f32 to vector<16x512xf32>
    %33 = arith.maximumf %31, %32 : vector<16x512xf32>
    %c0_27 = arith.constant 0 : index
    %c0_28 = arith.constant 0 : index
    %c0_29 = arith.constant 0 : index
    %34 = vector.load %arg8[%c0_27, %c0_28, %c0_29] : memref<1x16x512xf32, #tpu.memory_space<vmem>>, vector<1x16x512xf32>
    %35 = vector.shape_cast %34 : vector<1x16x512xf32> to vector<16x512xf32>
    %36 = vector.shape_cast %33 : vector<16x512xf32> to vector<1x16x512xf32>
    tpu.vector_store %arg8[%c0_27, %c0_28, %c0_29], %36 {strides = array<i32>} : memref<1x16x512xf32, #tpu.memory_space<vmem>>, vector<1x16x512xf32>,
    return
  }
  func.func @transform_0(%arg0: i32) -> (i32, i32, i32) {
    %c0_i32 = arith.constant 0 : i32
    %c0_i32_0 = arith.constant 0 : i32
    %c0_i32_1 = arith.constant 0 : i32
    return %arg0, %c0_i32, %c0_i32_0 : i32, i32, i32
  }
  func.func @transform_1(%arg0: i32) -> (i32, i32) {
    %c0_i32 = arith.constant 0 : i32
    %c0_i32_0 = arith.constant 0 : i32
    %c0_i32_1 = arith.constant 0 : i32
    return %c0_i32, %c0_i32_0 : i32, i32
  }
  func.func @transform_2(%arg0: i32) -> (i32, i32) {
    %c0_i32 = arith.constant 0 : i32
    %c0_i32_0 = arith.constant 0 : i32
    %c0_i32_1 = arith.constant 0 : i32
    return %c0_i32, %c0_i32_0 : i32, i32
  }
  func.func @transform_3(%arg0: i32) -> (i32, i32) {
    %c0_i32 = arith.constant 0 : i32
    %c0_i32_0 = arith.constant 0 : i32
    %c0_i32_1 = arith.constant 0 : i32
    return %c0_i32, %c0_i32_0 : i32, i32
  }
  func.func @transform_4(%arg0: i32) -> (i32, i32) {
    %c0_i32 = arith.constant 0 : i32
    %c0_i32_0 = arith.constant 0 : i32
    %c0_i32_1 = arith.constant 0 : i32
    return %c0_i32, %c0_i32_0 : i32, i32
  }
  func.func @transform_5(%arg0: i32) -> (i32, i32) {
    %c0_i32 = arith.constant 0 : i32
    %c0_i32_0 = arith.constant 0 : i32
    %c0_i32_1 = arith.constant 0 : i32
    return %c0_i32, %c0_i32_0 : i32, i32
  }
  func.func @transform_6(%arg0: i32) -> (i32, i32) {
    %c0_i32 = arith.constant 0 : i32
    %c0_i32_0 = arith.constant 0 : i32
    %c0_i32_1 = arith.constant 0 : i32
    return %c0_i32, %c0_i32_0 : i32, i32
  }
  func.func @transform_7(%arg0: i32) -> (i32, i32, i32) {
    %c0_i32 = arith.constant 0 : i32
    %c0_i32_0 = arith.constant 0 : i32
    %c0_i32_1 = arith.constant 0 : i32
    return %arg0, %c0_i32, %c0_i32_0 : i32, i32, i32
  }
}

</mosaic_0001>

<llo_original>
// kernel: tpu_custom_call.1
$region0: #{tpu_custom_call.1}
  #allocation0 [shape = 'u32[]', space=smem, size = 0x4, offset = 0x4, fixed_abs, tag = 'smem constant byte address 0x4 - core index']
  #allocation1 [shape = 'u32[144,128]{1,0:T(1,128)}', space=vmem, size = 0x12000, scoped, tag = 'internal scratch']
  #allocation2 [shape = 'f32[18,128]{1,0:T(8,128)}', space=vmem, size = 0x3000, scoped, tag = 'scratch operand']
  %s0 = inlined_call_operand.hbm [shape: f32[2,16,512], index: 0, kind: input, shape index: {}]
  %s1 = inlined_call_operand.hbm [shape: bf16[512,128], index: 1, kind: input, shape index: {}]
  %s2 = inlined_call_operand.vmem [shape: f32[1,128], index: 2, kind: input, shape index: {}]
  %s3 = inlined_call_operand.hbm [shape: bf16[384,128], index: 3, kind: input, shape index: {}]
  %s4 = inlined_call_operand.vmem [shape: f32[1,128], index: 4, kind: input, shape index: {}]
  %s5 = inlined_call_operand.hbm [shape: bf16[128,512], index: 5, kind: input, shape index: {}]
  %s6 = inlined_call_operand.vmem [shape: f32[1,512], index: 6, kind: input, shape index: {}]
  %s7 = inlined_call_operand.hbm [shape: f32[2,16,512], index: 7, kind: output, shape index: {}]
  %s8 = sld [smem:[#allocation0]]
  $region77: #{tpu_custom_call.1} parent=0
    _
  %s10 = ssub.s32 1, %s8
  %s11 = scalar_select 0, %s10, %s8
  $region1: #{tpu_custom_call.1} parent=0
    #allocation3 [shape = 'u8[65536]{0}', space=vmem, size = 0x10000, scoped, tag = 'input window, operand 0']
    #allocation4 [shape = 's32[2]{0}', space=sflag, size = 0x8, scoped, tag = 'scoped memory for tpu_custom_call.1']
    #allocation5 [shape = 's32[2]{0}', space=sflag, size = 0x8, scoped, tag = 'scoped memory for tpu_custom_call.1']
    #allocation6 [shape = 'u8[131072]{0}', space=vmem, size = 0x20000, scoped, tag = 'input window, operand 1, single buffered']
    #allocation7 [shape = 's32[1]{0}', space=sflag, size = 0x4, scoped, tag = 'scoped memory for tpu_custom_call.1']
    #allocation8 [shape = 'u8[98304]{0}', space=vmem, size = 0x18000, scoped, tag = 'input window, operand 3, single buffered']
    #allocation9 [shape = 'u8[131072]{0}', space=vmem, size = 0x20000, scoped, tag = 'input window, operand 5, single buffered']
    #allocation10 [shape = 's32[1]{0}', space=sflag, size = 0x4, scoped, tag = 'scoped memory for tpu_custom_call.1']
    #allocation11 [shape = 'u8[65536]{0}', space=vmem, size = 0x10000, scoped, tag = 'output window, operand 0']
    %12 = vsyncpa [#allocation4], 0
    %s13 = scalar_lea.sflag [#allocation4], 1
    %14 = vsyncpa %s13, 0
    %15 = vsyncpa [#allocation7], 0
    %16 = vsyncpa [#allocation10], 0
    %17 = vsyncpa [#allocation5], 0
    %s18 = scalar_lea.sflag [#allocation5], 1
    %19 = vsyncpa %s18, 0
    loop: start=0, step=1, limit=4
    $region2: #{tpu_custom_call.1} parent=1 // loop_pre_header
      _
    $region3: #{tpu_custom_call.1} parent=1 // loop_header
      %s21 = sphi 0, %s25
      %p22 = scmp.ge.s32.totalorder %s21, 4
      %s31 = sphi 0, %s33
      %s34 = sphi 0, %s31
      %s35 = sphi 0, %s34
      %s51 = sphi 0, %s35
      %s55 = sphi 0, %s55
      %s57 = sphi 0, %s55
      %s58 = sphi 0, %s57
      %s72 = sphi 0, %s58
      %s76 = sphi 0, %s76
      %s78 = sphi 0, %s76
      %s79 = sphi 0, %s78
      %s93 = sphi 0, %s79
      %s97 = sphi 0, %s97
      %s99 = sphi 0, %s97
      %s100 = sphi 0, %s99
      %s114 = sphi 0, %s100
      %s118 = sphi 0, %s118
      %s120 = sphi 0, %s118
      %s121 = sphi 0, %s120
      %s135 = sphi 0, %s121
      %s139 = sphi 0, %s139
      %s141 = sphi 0, %s139
      %s142 = sphi 0, %s141
      %s156 = sphi 0, %s142
      %s160 = sphi 0, %s160
      %s162 = sphi 0, %s160
      %s163 = sphi 0, %s162
      %s177 = sphi 0, %s163
      %s183 = sphi 0, %s185
      %s186 = sphi 0, %s183
      %s187 = sphi 0, %s186
      %s203 = sphi 0, %s187
    $region4: #{tpu_custom_call.1} parent=1 // loop_header_branch
      %24 = sbr.rel (%p22) target = $region8
    $region5: #{tpu_custom_call.1} parent=1 // loop_body
      %s26 = ssub.s32 %s21, 1
      %s27 = ssub.s32 %s21, 2
      %s28 = sadd.s32 %s21, 1
      %s29 = ssub.s32 %s21, %s28
      %p30 = scmp.eq.s32.totalorder %s29, 0
      %s32 = sadd.s32 %s31, 1
      %s33 = scalar_select %p30, %s31, %s32
      %p36 = pneg %p30
      %p37 = scmp.eq.s32.totalorder %s21, 1
      %p38 = por %p36, %p37
      %p39 = scmp.ne.s32.totalorder %s31, %s34
      %p40 = scmp.eq.s32.totalorder %s21, 0
      %p41 = por %p39, %p40
      %p42 = scmp.ne.s32.totalorder %s31, %s34
      %p43 = scmp.eq.s32.totalorder %s26, 1
      %p44 = por %p42, %p43
      %p45 = scmp.ne.s32.totalorder %s34, %s35
      %p46 = scmp.eq.s32.totalorder %s26, 0
      %p47 = por %p45, %p46
      %p48 = scmp.ne.s32.totalorder %s34, %s35
      %p49 = scmp.eq.s32.totalorder %s27, 1
      %p50 = por %p48, %p49
      %p52 = scmp.ne.s32.totalorder %s35, %s51
      %p53 = scmp.eq.s32.totalorder %s27, 0
      %p54 = por %p52, %p53
      %s56 = sadd.s32 %s55, 1
      %p59 = scmp.eq.s32.totalorder %s21, 1
      %p60 = scmp.ne.s32.totalorder %s55, %s57
      %p61 = scmp.eq.s32.totalorder %s21, 0
      %p62 = por %p60, %p61
      %p63 = scmp.ne.s32.totalorder %s55, %s57
      %p64 = scmp.eq.s32.totalorder %s26, 1
      %p65 = por %p63, %p64
      %p66 = scmp.ne.s32.totalorder %s57, %s58
      %p67 = scmp.eq.s32.totalorder %s26, 0
      %p68 = por %p66, %p67
      %p69 = scmp.ne.s32.totalorder %s57, %s58
      %p70 = scmp.eq.s32.totalorder %s27, 1
      %p71 = por %p69, %p70
      %p73 = scmp.ne.s32.totalorder %s58, %s72
      %p74 = scmp.eq.s32.totalorder %s27, 0
      %p75 = por %p73, %p74
      %s77 = sadd.s32 %s76, 1
      %p80 = scmp.eq.s32.totalorder %s21, 1
      %p81 = scmp.ne.s32.totalorder %s76, %s78
      %p82 = scmp.eq.s32.totalorder %s21, 0
      %p83 = por %p81, %p82
      %p84 = scmp.ne.s32.totalorder %s76, %s78
      %p85 = scmp.eq.s32.totalorder %s26, 1
      %p86 = por %p84, %p85
      %p87 = scmp.ne.s32.totalorder %s78, %s79
      %p88 = scmp.eq.s32.totalorder %s26, 0
      %p89 = por %p87, %p88
      %p90 = scmp.ne.s32.totalorder %s78, %s79
      %p91 = scmp.eq.s32.totalorder %s27, 1
      %p92 = por %p90, %p91
      %p94 = scmp.ne.s32.totalorder %s79, %s93
      %p95 = scmp.eq.s32.totalorder %s27, 0
      %p96 = por %p94, %p95
      %s98 = sadd.s32 %s97, 1
      %p101 = scmp.eq.s32.totalorder %s21, 1
      %p102 = scmp.ne.s32.totalorder %s97, %s99
      %p103 = scmp.eq.s32.totalorder %s21, 0
      %p104 = por %p102, %p103
      %p105 = scmp.ne.s32.totalorder %s97, %s99
      %p106 = scmp.eq.s32.totalorder %s26, 1
      %p107 = por %p105, %p106
      %p108 = scmp.ne.s32.totalorder %s99, %s100
      %p109 = scmp.eq.s32.totalorder %s26, 0
      %p110 = por %p108, %p109
      %p111 = scmp.ne.s32.totalorder %s99, %s100
      %p112 = scmp.eq.s32.totalorder %s27, 1
      %p113 = por %p111, %p112
      %p115 = scmp.ne.s32.totalorder %s100, %s114
      %p116 = scmp.eq.s32.totalorder %s27, 0
      %p117 = por %p115, %p116
      %s119 = sadd.s32 %s118, 1
      %p122 = scmp.eq.s32.totalorder %s21, 1
      %p123 = scmp.ne.s32.totalorder %s118, %s120
      %p124 = scmp.eq.s32.totalorder %s21, 0
      %p125 = por %p123, %p124
      %p126 = scmp.ne.s32.totalorder %s118, %s120
      %p127 = scmp.eq.s32.totalorder %s26, 1
      %p128 = por %p126, %p127
      %p129 = scmp.ne.s32.totalorder %s120, %s121
      %p130 = scmp.eq.s32.totalorder %s26, 0
      %p131 = por %p129, %p130
      %p132 = scmp.ne.s32.totalorder %s120, %s121
      %p133 = scmp.eq.s32.totalorder %s27, 1
      %p134 = por %p132, %p133
      %p136 = scmp.ne.s32.totalorder %s121, %s135
      %p137 = scmp.eq.s32.totalorder %s27, 0
      %p138 = por %p136, %p137
      %s140 = sadd.s32 %s139, 1
      %p143 = scmp.eq.s32.totalorder %s21, 1
      %p144 = scmp.ne.s32.totalorder %s139, %s141
      %p145 = scmp.eq.s32.totalorder %s21, 0
      %p146 = por %p144, %p145
      %p147 = scmp.ne.s32.totalorder %s139, %s141
      %p148 = scmp.eq.s32.totalorder %s26, 1
      %p149 = por %p147, %p148
      %p150 = scmp.ne.s32.totalorder %s141, %s142
      %p151 = scmp.eq.s32.totalorder %s26, 0
      %p152 = por %p150, %p151
      %p153 = scmp.ne.s32.totalorder %s141, %s142
      %p154 = scmp.eq.s32.totalorder %s27, 1
      %p155 = por %p153, %p154
      %p157 = scmp.ne.s32.totalorder %s142, %s156
      %p158 = scmp.eq.s32.totalorder %s27, 0
      %p159 = por %p157, %p158
      %s161 = sadd.s32 %s160, 1
      %p164 = scmp.eq.s32.totalorder %s21, 1
      %p165 = scmp.ne.s32.totalorder %s160, %s162
      %p166 = scmp.eq.s32.totalorder %s21, 0
      %p167 = por %p165, %p166
      %p168 = scmp.ne.s32.totalorder %s160, %s162
      %p169 = scmp.eq.s32.totalorder %s26, 1
      %p170 = por %p168, %p169
      %p171 = scmp.ne.s32.totalorder %s162, %s163
      %p172 = scmp.eq.s32.totalorder %s26, 0
      %p173 = por %p171, %p172
      %p174 = scmp.ne.s32.totalorder %s162, %s163
      %p175 = scmp.eq.s32.totalorder %s27, 1
      %p176 = por %p174, %p175
      %p178 = scmp.ne.s32.totalorder %s163, %s177
      %p179 = scmp.eq.s32.totalorder %s27, 0
      %p180 = por %p178, %p179
      %s181 = ssub.s32 %s21, %s28
      %p182 = scmp.eq.s32.totalorder %s181, 0
      %s184 = sadd.s32 %s183, 1
      %s185 = scalar_select %p182, %s183, %s184
      %p188 = pneg %p182
      %p189 = scmp.eq.s32.totalorder %s21, 1
      %p190 = por %p188, %p189
      %p191 = scmp.ne.s32.totalorder %s183, %s186
      %p192 = scmp.eq.s32.totalorder %s21, 0
      %p193 = por %p191, %p192
      %p194 = scmp.ne.s32.totalorder %s183, %s186
      %p195 = scmp.eq.s32.totalorder %s26, 1
      %p196 = por %p194, %p195
      %p197 = scmp.ne.s32.totalorder %s186, %s187
      %p198 = scmp.eq.s32.totalorder %s26, 0
      %p199 = por %p197, %p198
      %p200 = scmp.ne.s32.totalorder %s186, %s187
      %p201 = scmp.eq.s32.totalorder %s27, 1
      %p202 = por %p200, %p201
      %p204 = scmp.ne.s32.totalorder %s187, %s203
      %p205 = scmp.eq.s32.totalorder %s27, 0
      %p206 = por %p204, %p205
      %p207 = scmp.le.s32.totalorder 1, %s21
      %p208 = scmp.lt.s32.totalorder %s21, 3
      %p209 = pnand %p207, %p208
      %p210 = pneg %p209
      // Predicated region
      $region9: #{tpu_custom_call.1} parent=5 // pred_check
        _
      $region10: #{tpu_custom_call.1} parent=5 // pred_check_branch
        %212 = sbr.rel (%p209) target = $region12
      $region11: #{tpu_custom_call.1} parent=5 // pred_region
        %s213 = ssub.s32 %s21, 1
        // Predicated region
        $region13: #{tpu_custom_call.1} parent=11 // pred_check
          %p214 = pneg %p68
        $region14: #{tpu_custom_call.1} parent=11 // pred_check_branch
          %216 = sbr.rel (%p214) target = $region16
        $region15: #{tpu_custom_call.1} parent=11 // pred_region
          %s218 = ssub.s32 4096, 4096
          %219 = vsyncadd [#allocation7], %s218
          %s220 = sshll.u32 [#allocation6], 4
          %s221 = int_to_ptr.vmem [resolvable:$true] %s220
          %226 = dma.hbm_to_vmem [thread:$0]  %s1, 4096, %s221, [#allocation7], 64, 64, 4
        $region16: #{tpu_custom_call.1} parent=11 // pred_fallthru
          _
        // Predicated region
        $region17: #{tpu_custom_call.1} parent=11 // pred_check
          %p227 = pneg %p89
        $region18: #{tpu_custom_call.1} parent=11 // pred_check_branch
          %229 = sbr.rel (%p227) target = $region20
        $region19: #{tpu_custom_call.1} parent=11 // pred_region
          _
        $region20: #{tpu_custom_call.1} parent=11 // pred_fallthru
          _
        // Predicated region
        $region21: #{tpu_custom_call.1} parent=11 // pred_check
          %p230 = pneg %p110
        $region22: #{tpu_custom_call.1} parent=11 // pred_check_branch
          %232 = sbr.rel (%p230) target = $region24
        $region23: #{tpu_custom_call.1} parent=11 // pred_region
          %s234 = ssub.s32 3072, 3072
          %235 = vsyncadd [#allocation7], %s234
          %s236 = sshll.u32 [#allocation8], 4
          %s237 = int_to_ptr.vmem [resolvable:$true] %s236
          %242 = dma.hbm_to_vmem [thread:$0]  %s3, 3072, %s237, [#allocation7], 64, 64, 4
        $region24: #{tpu_custom_call.1} parent=11 // pred_fallthru
          _
        // Predicated region
        $region25: #{tpu_custom_call.1} parent=11 // pred_check
          %p243 = pneg %p131
        $region26: #{tpu_custom_call.1} parent=11 // pred_check_branch
          %245 = sbr.rel (%p243) target = $region28
        $region27: #{tpu_custom_call.1} parent=11 // pred_region
          _
        $region28: #{tpu_custom_call.1} parent=11 // pred_fallthru
          _
        // Predicated region
        $region29: #{tpu_custom_call.1} parent=11 // pred_check
          %p246 = pneg %p152
        $region30: #{tpu_custom_call.1} parent=11 // pred_check_branch
          %248 = sbr.rel (%p246) target = $region32
        $region31: #{tpu_custom_call.1} parent=11 // pred_region
          %s250 = ssub.s32 4096, 4096
          %251 = vsyncadd [#allocation10], %s250
          %s252 = sshll.u32 [#allocation9], 4
          %s253 = int_to_ptr.vmem [resolvable:$true] %s252
          %258 = dma.hbm_to_vmem [thread:$0]  %s5, 4096, %s253, [#allocation10], 256, 256, 16
        $region32: #{tpu_custom_call.1} parent=11 // pred_fallthru
          _
        // Predicated region
        $region33: #{tpu_custom_call.1} parent=11 // pred_check
          %p259 = pneg %p173
        $region34: #{tpu_custom_call.1} parent=11 // pred_check_branch
          %261 = sbr.rel (%p259) target = $region36
        $region35: #{tpu_custom_call.1} parent=11 // pred_region
          _
        $region36: #{tpu_custom_call.1} parent=11 // pred_fallthru
          _
      $region12: #{tpu_custom_call.1} parent=5 // pred_fallthru
        _
      %p262 = scmp.lt.s32.totalorder %s21, 2
      // Predicated region
      $region37: #{tpu_custom_call.1} parent=5 // pred_check
        %p263 = pneg %p262
      $region38: #{tpu_custom_call.1} parent=5 // pred_check_branch
        %265 = sbr.rel (%p263) target = $region40
      $region39: #{tpu_custom_call.1} parent=5 // pred_region
        // Predicated region
        $region41: #{tpu_custom_call.1} parent=39 // pred_check
          %p266 = pneg %p41
        $region42: #{tpu_custom_call.1} parent=39 // pred_check_branch
          %268 = sbr.rel (%p266) target = $region44
        $region43: #{tpu_custom_call.1} parent=39 // pred_region
          %s269 = sand.u32 %s31, 1
          %s270 = scalar_lea.sflag [#allocation4], %s269
          %s271 = sand.u32 %s31, 1
          %s272 = smul.addr %s271, 64
          %s273 = scalar_lea.vmem [#allocation3], %s272
          %s275 = ssub.s32 1024, 1024
          %276 = vsyncadd %s270, %s275
          %s277 = smul.addr %s21, 8
          %s278 = smul.addr %s277, 128
          %s279 = scalar_lea.hbm %s0, %s278
          %s280 = sshll.u32 %s273, 4
          %s281 = int_to_ptr.vmem [resolvable:$true] %s280
          %286 = dma.hbm_to_vmem [thread:$0]  %s279, 1024, %s281, %s270, 512, 512, 32
        $region44: #{tpu_custom_call.1} parent=39 // pred_fallthru
          _
      $region40: #{tpu_custom_call.1} parent=5 // pred_fallthru
        _
      %p287 = scmp.le.s32.totalorder 1, %s21
      %p288 = scmp.lt.s32.totalorder %s21, 3
      %p289 = pnand %p287, %p288
      %p290 = pneg %p289
      // Predicated region
      $region45: #{tpu_custom_call.1} parent=5 // pred_check
        _
      $region46: #{tpu_custom_call.1} parent=5 // pred_check_branch
        %292 = sbr.rel (%p289) target = $region48
      $region47: #{tpu_custom_call.1} parent=5 // pred_region
        %s293 = ssub.s32 %s21, 1
        %s294 = sand.u32 %s34, 1
        %s295 = scalar_lea.sflag [#allocation4], %s294
        %s296 = sand.u32 %s34, 1
        %s297 = smul.addr %s296, 64
        %s298 = scalar_lea.vmem [#allocation3], %s297
        // Predicated region
        $region49: #{tpu_custom_call.1} parent=47 // pred_check
          %p299 = pneg %p47
        $region50: #{tpu_custom_call.1} parent=47 // pred_check_branch
          %301 = sbr.rel (%p299) target = $region52
        $region51: #{tpu_custom_call.1} parent=47 // pred_region
          %302 = dma.done %s295, 1024
        $region52: #{tpu_custom_call.1} parent=47 // pred_fallthru
          _
        // Predicated region
        $region53: #{tpu_custom_call.1} parent=47 // pred_check
          %p303 = pneg %p68
        $region54: #{tpu_custom_call.1} parent=47 // pred_check_branch
          %305 = sbr.rel (%p303) target = $region56
        $region55: #{tpu_custom_call.1} parent=47 // pred_region
          %306 = dma.done [#allocation7], 4096
        $region56: #{tpu_custom_call.1} parent=47 // pred_fallthru
          _
        // Predicated region
        $region57: #{tpu_custom_call.1} parent=47 // pred_check
          %p307 = pneg %p110
        $region58: #{tpu_custom_call.1} parent=47 // pred_check_branch
          %309 = sbr.rel (%p307) target = $region60
        $region59: #{tpu_custom_call.1} parent=47 // pred_region
          %310 = dma.done [#allocation7], 3072
        $region60: #{tpu_custom_call.1} parent=47 // pred_fallthru
          _
        // Predicated region
        $region61: #{tpu_custom_call.1} parent=47 // pred_check
          %p311 = pneg %p152
        $region62: #{tpu_custom_call.1} parent=47 // pred_check_branch
          %313 = sbr.rel (%p311) target = $region64
        $region63: #{tpu_custom_call.1} parent=47 // pred_region
          %314 = dma.done [#allocation10], 4096
        $region64: #{tpu_custom_call.1} parent=47 // pred_fallthru
          _
        %s315 = sand.u32 %s34, 1
        %s316 = scalar_lea.sflag [#allocation4], %s315
        %s317 = sand.u32 %s34, 1
        %s318 = smul.addr %s317, 64
        %s319 = scalar_lea.vmem [#allocation3], %s318
        %p320 = pneg %p47
        %p321 = pneg %p44
        %p322 = pneg %p68
        %p323 = pneg %p65
        %p324 = pneg %p89
        %p325 = pneg %p86
        %p326 = pneg %p110
        %p327 = pneg %p107
        %p328 = pneg %p131
        %p329 = pneg %p128
        %p330 = pneg %p152
        %p331 = pneg %p149
        %p332 = pneg %p173
        %p333 = pneg %p170
        %p334 = pneg %p199
        %p335 = pneg %p196
        %s336 = sand.u32 %s186, 1
        %s337 = scalar_lea.sflag [#allocation5], %s336
        %s338 = sand.u32 %s186, 1
        %s339 = smul.addr %s338, 64
        %s340 = scalar_lea.vmem [#allocation11], %s339
        %v342 = vld [vmem:[%s298] sm:$0xff]
        %v343 = vld [vmem:[%s298 + $0x8] sm:$0xff]
        %v344 = vld [vmem:[%s298 + $0x10] sm:$0xff]
        %v345 = vld [vmem:[%s298 + $0x18] sm:$0xff]
        %v346 = vld [vmem:[%s298 + $0x20] sm:$0xff]
        %v347 = vld [vmem:[%s298 + $0x28] sm:$0xff]
        %v348 = vld [vmem:[%s298 + $0x30] sm:$0xff]
        %v349 = vld [vmem:[%s298 + $0x38] sm:$0xff]
        %v350 = vpack.c.bf16 %v346, %v342
        %v351 = vpack.c.bf16 %v347, %v343
        %v352 = vpack.c.bf16 %v348, %v344
        %v353 = vpack.c.bf16 %v349, %v345
        %v354 = vld [vmem:[#allocation6] sm:$0xf]
        %v355 = vld [vmem:[#allocation6 + $0x4] sm:$0xf]
        %v356 = vld [vmem:[#allocation6 + $0x8] sm:$0xf]
        %v357 = vld [vmem:[#allocation6 + $0xc] sm:$0xf]
        %v358 = vld [vmem:[#allocation6 + $0x10] sm:$0xf]
        %v359 = vld [vmem:[#allocation6 + $0x14] sm:$0xf]
        %v360 = vld [vmem:[#allocation6 + $0x18] sm:$0xf]
        %v361 = vld [vmem:[#allocation6 + $0x1c] sm:$0xf]
        %v362 = vld [vmem:[#allocation6 + $0x20] sm:$0xf]
        %v363 = vld [vmem:[#allocation6 + $0x24] sm:$0xf]
        %v364 = vld [vmem:[#allocation6 + $0x28] sm:$0xf]
        %v365 = vld [vmem:[#allocation6 + $0x2c] sm:$0xf]
        %v366 = vld [vmem:[#allocation6 + $0x30] sm:$0xf]
        %v367 = vld [vmem:[#allocation6 + $0x34] sm:$0xf]
        %v368 = vld [vmem:[#allocation6 + $0x38] sm:$0xf]
        %v369 = vld [vmem:[#allocation6 + $0x3c] sm:$0xf]
        %v370 = vld [vmem:[#allocation6 + $0x40] sm:$0xf]
        %v371 = vld [vmem:[#allocation6 + $0x44] sm:$0xf]
        %v372 = vld [vmem:[#allocation6 + $0x48] sm:$0xf]
        %v373 = vld [vmem:[#allocation6 + $0x4c] sm:$0xf]
        %v374 = vld [vmem:[#allocation6 + $0x50] sm:$0xf]
        %v375 = vld [vmem:[#allocation6 + $0x54] sm:$0xf]
        %v376 = vld [vmem:[#allocation6 + $0x58] sm:$0xf]
        %v377 = vld [vmem:[#allocation6 + $0x5c] sm:$0xf]
        %v378 = vld [vmem:[#allocation6 + $0x60] sm:$0xf]
        %v379 = vld [vmem:[#allocation6 + $0x64] sm:$0xf]
        %v380 = vld [vmem:[#allocation6 + $0x68] sm:$0xf]
        %v381 = vld [vmem:[#allocation6 + $0x6c] sm:$0xf]
        %v382 = vld [vmem:[#allocation6 + $0x70] sm:$0xf]
        %v383 = vld [vmem:[#allocation6 + $0x74] sm:$0xf]
        %v384 = vld [vmem:[#allocation6 + $0x78] sm:$0xf]
        %v385 = vld [vmem:[#allocation6 + $0x7c] sm:$0xf]
        %v386 = vld [vmem:[#allocation6 + $0x80] sm:$0xf]
        %v387 = vld [vmem:[#allocation6 + $0x84] sm:$0xf]
        %v388 = vld [vmem:[#allocation6 + $0x88] sm:$0xf]
        %v389 = vld [vmem:[#allocation6 + $0x8c] sm:$0xf]
        %v390 = vld [vmem:[#allocation6 + $0x90] sm:$0xf]
        %v391 = vld [vmem:[#allocation6 + $0x94] sm:$0xf]
        %v392 = vld [vmem:[#allocation6 + $0x98] sm:$0xf]
        %v393 = vld [vmem:[#allocation6 + $0x9c] sm:$0xf]
        %v394 = vld [vmem:[#allocation6 + $0xa0] sm:$0xf]
        %v395 = vld [vmem:[#allocation6 + $0xa4] sm:$0xf]
        %v396 = vld [vmem:[#allocation6 + $0xa8] sm:$0xf]
        %v397 = vld [vmem:[#allocation6 + $0xac] sm:$0xf]
        %v398 = vld [vmem:[#allocation6 + $0xb0] sm:$0xf]
        %v399 = vld [vmem:[#allocation6 + $0xb4] sm:$0xf]
        %v400 = vld [vmem:[#allocation6 + $0xb8] sm:$0xf]
        %v401 = vld [vmem:[#allocation6 + $0xbc] sm:$0xf]
        %v402 = vld [vmem:[#allocation6 + $0xc0] sm:$0xf]
        %v403 = vld [vmem:[#allocation6 + $0xc4] sm:$0xf]
        %v404 = vld [vmem:[#allocation6 + $0xc8] sm:$0xf]
        %v405 = vld [vmem:[#allocation6 + $0xcc] sm:$0xf]
        %v406 = vld [vmem:[#allocation6 + $0xd0] sm:$0xf]
        %v407 = vld [vmem:[#allocation6 + $0xd4] sm:$0xf]
        %v408 = vld [vmem:[#allocation6 + $0xd8] sm:$0xf]
        %v409 = vld [vmem:[#allocation6 + $0xdc] sm:$0xf]
        %v410 = vld [vmem:[#allocation6 + $0xe0] sm:$0xf]
        %v411 = vld [vmem:[#allocation6 + $0xe4] sm:$0xf]
        %v412 = vld [vmem:[#allocation6 + $0xe8] sm:$0xf]
        %v413 = vld [vmem:[#allocation6 + $0xec] sm:$0xf]
        %v414 = vld [vmem:[#allocation6 + $0xf0] sm:$0xf]
        %v415 = vld [vmem:[#allocation6 + $0xf4] sm:$0xf]
        %v416 = vld [vmem:[#allocation6 + $0xf8] sm:$0xf]
        %v417 = vld [vmem:[#allocation6 + $0xfc] sm:$0xf]
        %v418 = vld [vmem:[%s2] sm:$0x1]
        %v420 = vlaneseq
        %v421 = vshrl.u32 %v420, 7
        %v422 = vsub.s32 0, %v421
        %v423 = vrot.slane %v418, %v422
        %v489 = vunpack.c.l.b16 %v354
        %v490 = vunpack.c.l.b16 %v355
        %v491 = vunpack.c.l.b16 %v356
        %v492 = vunpack.c.l.b16 %v357
        %v493 = vunpack.c.l.b16 %v358
        %v494 = vunpack.c.l.b16 %v359
        %v495 = vunpack.c.l.b16 %v360
        %v496 = vunpack.c.l.b16 %v361
        %v497 = vunpack.c.l.b16 %v362
        %v498 = vunpack.c.l.b16 %v363
        %v499 = vunpack.c.l.b16 %v364
        %v500 = vunpack.c.l.b16 %v365
        %v501 = vunpack.c.l.b16 %v366
        %v502 = vunpack.c.l.b16 %v367
        %v503 = vunpack.c.l.b16 %v368
        %v504 = vunpack.c.l.b16 %v369
        %v505 = vunpack.c.l.b16 %v370
        %v506 = vunpack.c.l.b16 %v371
        %v507 = vunpack.c.l.b16 %v372
        %v508 = vunpack.c.l.b16 %v373
        %v509 = vunpack.c.l.b16 %v374
        %v510 = vunpack.c.l.b16 %v375
        %v511 = vunpack.c.l.b16 %v376
        %v512 = vunpack.c.l.b16 %v377
        %v513 = vunpack.c.l.b16 %v378
        %v514 = vunpack.c.l.b16 %v379
        %v515 = vunpack.c.l.b16 %v380
        %v516 = vunpack.c.l.b16 %v381
        %v517 = vunpack.c.l.b16 %v382
        %v518 = vunpack.c.l.b16 %v383
        %v519 = vunpack.c.l.b16 %v384
        %v520 = vunpack.c.l.b16 %v385
        %v521 = vunpack.c.l.b16 %v386
        %v522 = vunpack.c.l.b16 %v387
        %v523 = vunpack.c.l.b16 %v388
        %v524 = vunpack.c.l.b16 %v389
        %v525 = vunpack.c.l.b16 %v390
        %v526 = vunpack.c.l.b16 %v391
        %v527 = vunpack.c.l.b16 %v392
        %v528 = vunpack.c.l.b16 %v393
        %v529 = vunpack.c.l.b16 %v394
        %v530 = vunpack.c.l.b16 %v395
        %v531 = vunpack.c.l.b16 %v396
        %v532 = vunpack.c.l.b16 %v397
        %v533 = vunpack.c.l.b16 %v398
        %v534 = vunpack.c.l.b16 %v399
        %v535 = vunpack.c.l.b16 %v400
        %v536 = vunpack.c.l.b16 %v401
        %v537 = vunpack.c.l.b16 %v402
        %v538 = vunpack.c.l.b16 %v403
        %v539 = vunpack.c.l.b16 %v404
        %v540 = vunpack.c.l.b16 %v405
        %v541 = vunpack.c.l.b16 %v406
        %v542 = vunpack.c.l.b16 %v407
        %v543 = vunpack.c.l.b16 %v408
        %v544 = vunpack.c.l.b16 %v409
        %v545 = vunpack.c.l.b16 %v410
        %v546 = vunpack.c.l.b16 %v411
        %v547 = vunpack.c.l.b16 %v412
        %v548 = vunpack.c.l.b16 %v413
        %v549 = vunpack.c.l.b16 %v414
        %v550 = vunpack.c.l.b16 %v415
        %v551 = vunpack.c.l.b16 %v416
        %v552 = vunpack.c.l.b16 %v417
        %v553 = vpack.c.b16 %v490, %v489
        %v554 = vpack.c.b16 %v492, %v491
        %v555 = vpack.c.b16 %v494, %v493
        %v556 = vpack.c.b16 %v496, %v495
        %v557 = vpack.c.b16 %v498, %v497
        %v558 = vpack.c.b16 %v500, %v499
        %v559 = vpack.c.b16 %v502, %v501
        %v560 = vpack.c.b16 %v504, %v503
        %v561 = vpack.c.b16 %v506, %v505
        %v562 = vpack.c.b16 %v508, %v507
        %v563 = vpack.c.b16 %v510, %v509
        %v564 = vpack.c.b16 %v512, %v511
        %v565 = vpack.c.b16 %v514, %v513
        %v566 = vpack.c.b16 %v516, %v515
        %v567 = vpack.c.b16 %v518, %v517
        %v568 = vpack.c.b16 %v520, %v519
        %v569 = vpack.c.b16 %v522, %v521
        %v570 = vpack.c.b16 %v524, %v523
        %v571 = vpack.c.b16 %v526, %v525
        %v572 = vpack.c.b16 %v528, %v527
        %v573 = vpack.c.b16 %v530, %v529
        %v574 = vpack.c.b16 %v532, %v531
        %v575 = vpack.c.b16 %v534, %v533
        %v576 = vpack.c.b16 %v536, %v535
        %v577 = vpack.c.b16 %v538, %v537
        %v578 = vpack.c.b16 %v540, %v539
        %v579 = vpack.c.b16 %v542, %v541
        %v580 = vpack.c.b16 %v544, %v543
        %v581 = vpack.c.b16 %v546, %v545
        %v582 = vpack.c.b16 %v548, %v547
        %v583 = vpack.c.b16 %v550, %v549
        %v584 = vpack.c.b16 %v552, %v551
        %617 = vmatprep.subr.bf16.mxu0 0
        %618 = vmatpush1.bf16.msra.mxu0 %v553
        %619 = vmatprep.subr.bf16.mxu0 0
        %620 = vmatpush1.bf16.msra.mxu0 %v554
        %621 = vmatprep.subr.bf16.mxu0 0
        %622 = vmatpush1.bf16.msra.mxu0 %v555
        %623 = vmatprep.subr.bf16.mxu0 0
        %624 = vmatpush1.bf16.msra.mxu0 %v556
        %625 = vmatprep.subr.bf16.mxu0 0
        %626 = vmatpush1.bf16.msra.mxu0 %v557
        %627 = vmatprep.subr.bf16.mxu0 0
        %628 = vmatpush1.bf16.msra.mxu0 %v558
        %629 = vmatprep.subr.bf16.mxu0 0
        %630 = vmatpush1.bf16.msra.mxu0 %v559
        %631 = vmatprep.subr.bf16.mxu0 0
        %632 = vmatpush1.bf16.msra.mxu0 %v560
        %633 = vmatprep.subr.bf16.mxu0 0
        %634 = vmatpush1.bf16.msra.mxu0 %v561
        %635 = vmatprep.subr.bf16.mxu0 0
        %636 = vmatpush1.bf16.msra.mxu0 %v562
        %637 = vmatprep.subr.bf16.mxu0 0
        %638 = vmatpush1.bf16.msra.mxu0 %v563
        %639 = vmatprep.subr.bf16.mxu0 0
        %640 = vmatpush1.bf16.msra.mxu0 %v564
        %641 = vmatprep.subr.bf16.mxu0 0
        %642 = vmatpush1.bf16.msra.mxu0 %v565
        %643 = vmatprep.subr.bf16.mxu0 0
        %644 = vmatpush1.bf16.msra.mxu0 %v566
        %645 = vmatprep.subr.bf16.mxu0 0
        %646 = vmatpush1.bf16.msra.mxu0 %v567
        %647 = vmatprep.subr.bf16.mxu0 0
        %648 = vmatpush1.bf16.msra.mxu0 %v568
        %649 = vmatprep.mubr.bf16.mxu0 %v351
        %650 = vmatmul.mubr.bf16.gmra.mrb[0].mxu0 %v350
        %v651 = vpop.f32.mrb[0].mxu0
        %v652 = vadd.f32 %v423, %v651
        %v653 = vpop.f32.mrb[0].mxu0
        %v654 = vpop.f32.mrb[0].mxu0
        %v655 = vadd.f32 %v423, %v654
        %v656 = vpop.f32.mrb[0].mxu0
        %657 = vdwg.mxu0
        %658 = vmatprep.subr.bf16.mxu0 0
        %659 = vmatpush1.bf16.msra.mxu0 %v569
        %660 = vmatprep.subr.bf16.mxu0 0
        %661 = vmatpush1.bf16.msra.mxu0 %v570
        %662 = vmatprep.subr.bf16.mxu0 0
        %663 = vmatpush1.bf16.msra.mxu0 %v571
        %664 = vmatprep.subr.bf16.mxu0 0
        %665 = vmatpush1.bf16.msra.mxu0 %v572
        %666 = vmatprep.subr.bf16.mxu0 0
        %667 = vmatpush1.bf16.msra.mxu0 %v573
        %668 = vmatprep.subr.bf16.mxu0 0
        %669 = vmatpush1.bf16.msra.mxu0 %v574
        %670 = vmatprep.subr.bf16.mxu0 0
        %671 = vmatpush1.bf16.msra.mxu0 %v575
        %672 = vmatprep.subr.bf16.mxu0 0
        %673 = vmatpush1.bf16.msra.mxu0 %v576
        %674 = vmatprep.subr.bf16.mxu0 0
        %675 = vmatpush1.bf16.msra.mxu0 %v577
        %676 = vmatprep.subr.bf16.mxu0 0
        %677 = vmatpush1.bf16.msra.mxu0 %v578
        %678 = vmatprep.subr.bf16.mxu0 0
        %679 = vmatpush1.bf16.msra.mxu0 %v579
        %680 = vmatprep.subr.bf16.mxu0 0
        %681 = vmatpush1.bf16.msra.mxu0 %v580
        %682 = vmatprep.subr.bf16.mxu0 0
        %683 = vmatpush1.bf16.msra.mxu0 %v581
        %684 = vmatprep.subr.bf16.mxu0 0
        %685 = vmatpush1.bf16.msra.mxu0 %v582
        %686 = vmatprep.subr.bf16.mxu0 0
        %687 = vmatpush1.bf16.msra.mxu0 %v583
        %688 = vmatprep.subr.bf16.mxu0 0
        %689 = vmatpush1.bf16.msra.mxu0 %v584
        %690 = vmatprep.mubr.bf16.mxu0 %v353
        %691 = vmatmul.mubr.bf16.gmra.mrb[0].mxu0 %v352
        %v692 = vpop.f32.mrb[0].mxu0
        %v693 = vadd.f32 %v652, %v692
        %v694 = vpop.f32.mrb[0].mxu0
        %v695 = vpop.f32.mrb[0].mxu0
        %v696 = vadd.f32 %v655, %v695
        %v697 = vpop.f32.mrb[0].mxu0
        %698 = vdwg.mxu0
        %v699 = vmax.f32 %v693, 0.0
        %v700 = vmax.f32 %v696, 0.0
        %701 = vst [vmem:[#allocation2] sm:$0x1] 0.0
        %702 = vst [vmem:[#allocation2 + $0x11] sm:$0x1] 0.0
        %703 = vst [vmem:[#allocation2 + $0x1] sm:$0xff] %v699
        %704 = vst [vmem:[#allocation2 + $0x9] sm:$0xff] %v700
        %v705 = vld [vmem:[#allocation2] sm:$0xff]
        %v706 = vld [vmem:[#allocation2 + $0x8] sm:$0xff]
        %v707 = vld [vmem:[#allocation2 + $0x2] sm:$0xff]
        %v708 = vld [vmem:[#allocation2 + $0xa] sm:$0xff]
        %v709 = vpack.c.bf16 %v706, %v705
        %v710 = vpack.c.bf16 %v700, %v699
        %v711 = vpack.c.bf16 %v708, %v707
        %v712 = vld [vmem:[#allocation8] sm:$0xf]
        %v713 = vld [vmem:[#allocation8 + $0x4] sm:$0xf]
        %v714 = vld [vmem:[#allocation8 + $0x8] sm:$0xf]
        %v715 = vld [vmem:[#allocation8 + $0xc] sm:$0xf]
        %v716 = vld [vmem:[#allocation8 + $0x10] sm:$0xf]
        %v717 = vld [vmem:[#allocation8 + $0x14] sm:$0xf]
        %v718 = vld [vmem:[#allocation8 + $0x18] sm:$0xf]
        %v719 = vld [vmem:[#allocation8 + $0x1c] sm:$0xf]
        %v720 = vld [vmem:[#allocation8 + $0x20] sm:$0xf]
        %v721 = vld [vmem:[#allocation8 + $0x24] sm:$0xf]
        %v722 = vld [vmem:[#allocation8 + $0x28] sm:$0xf]
        %v723 = vld [vmem:[#allocation8 + $0x2c] sm:$0xf]
        %v724 = vld [vmem:[#allocation8 + $0x30] sm:$0xf]
        %v725 = vld [vmem:[#allocation8 + $0x34] sm:$0xf]
        %v726 = vld [vmem:[#allocation8 + $0x38] sm:$0xf]
        %v727 = vld [vmem:[#allocation8 + $0x3c] sm:$0xf]
        %v728 = vld [vmem:[#allocation8 + $0x40] sm:$0xf]
        %v729 = vld [vmem:[#allocation8 + $0x44] sm:$0xf]
        %v730 = vld [vmem:[#allocation8 + $0x48] sm:$0xf]
        %v731 = vld [vmem:[#allocation8 + $0x4c] sm:$0xf]
        %v732 = vld [vmem:[#allocation8 + $0x50] sm:$0xf]
        %v733 = vld [vmem:[#allocation8 + $0x54] sm:$0xf]
        %v734 = vld [vmem:[#allocation8 + $0x58] sm:$0xf]
        %v735 = vld [vmem:[#allocation8 + $0x5c] sm:$0xf]
        %v736 = vld [vmem:[#allocation8 + $0x60] sm:$0xf]
        %v737 = vld [vmem:[#allocation8 + $0x64] sm:$0xf]
        %v738 = vld [vmem:[#allocation8 + $0x68] sm:$0xf]
        %v739 = vld [vmem:[#allocation8 + $0x6c] sm:$0xf]
        %v740 = vld [vmem:[#allocation8 + $0x70] sm:$0xf]
        %v741 = vld [vmem:[#allocation8 + $0x74] sm:$0xf]
        %v742 = vld [vmem:[#allocation8 + $0x78] sm:$0xf]
        %v743 = vld [vmem:[#allocation8 + $0x7c] sm:$0xf]
        %v744 = vld [vmem:[#allocation8 + $0x80] sm:$0xf]
        %v745 = vld [vmem:[#allocation8 + $0x84] sm:$0xf]
        %v746 = vld [vmem:[#allocation8 + $0x88] sm:$0xf]
        %v747 = vld [vmem:[#allocation8 + $0x8c] sm:$0xf]
        %v748 = vld [vmem:[#allocation8 + $0x90] sm:$0xf]
        %v749 = vld [vmem:[#allocation8 + $0x94] sm:$0xf]
        %v750 = vld [vmem:[#allocation8 + $0x98] sm:$0xf]
        %v751 = vld [vmem:[#allocation8 + $0x9c] sm:$0xf]
        %v752 = vld [vmem:[#allocation8 + $0xa0] sm:$0xf]
        %v753 = vld [vmem:[#allocation8 + $0xa4] sm:$0xf]
        %v754 = vld [vmem:[#allocation8 + $0xa8] sm:$0xf]
        %v755 = vld [vmem:[#allocation8 + $0xac] sm:$0xf]
        %v756 = vld [vmem:[#allocation8 + $0xb0] sm:$0xf]
        %v757 = vld [vmem:[#allocation8 + $0xb4] sm:$0xf]
        %v758 = vld [vmem:[#allocation8 + $0xb8] sm:$0xf]
        %v759 = vld [vmem:[#allocation8 + $0xbc] sm:$0xf]
        %v760 = vld [vmem:[%s4] sm:$0x1]
        %v762 = vlaneseq
        %v763 = vshrl.u32 %v762, 7
        %v764 = vsub.s32 0, %v763
        %v765 = vrot.slane %v760, %v764
        %v815 = vunpack.c.l.b16 %v712
        %v816 = vunpack.c.l.b16 %v713
        %v817 = vunpack.c.l.b16 %v714
        %v818 = vunpack.c.l.b16 %v715
        %v819 = vunpack.c.l.b16 %v716
        %v820 = vunpack.c.l.b16 %v717
        %v821 = vunpack.c.l.b16 %v718
        %v822 = vunpack.c.l.b16 %v719
        %v823 = vunpack.c.l.b16 %v720
        %v824 = vunpack.c.l.b16 %v721
        %v825 = vunpack.c.l.b16 %v722
        %v826 = vunpack.c.l.b16 %v723
        %v827 = vunpack.c.l.b16 %v724
        %v828 = vunpack.c.l.b16 %v725
        %v829 = vunpack.c.l.b16 %v726
        %v830 = vunpack.c.l.b16 %v727
        %v831 = vunpack.c.l.b16 %v728
        %v832 = vunpack.c.l.b16 %v729
        %v833 = vunpack.c.l.b16 %v730
        %v834 = vunpack.c.l.b16 %v731
        %v835 = vunpack.c.l.b16 %v732
        %v836 = vunpack.c.l.b16 %v733
        %v837 = vunpack.c.l.b16 %v734
        %v838 = vunpack.c.l.b16 %v735
        %v839 = vunpack.c.l.b16 %v736
        %v840 = vunpack.c.l.b16 %v737
        %v841 = vunpack.c.l.b16 %v738
        %v842 = vunpack.c.l.b16 %v739
        %v843 = vunpack.c.l.b16 %v740
        %v844 = vunpack.c.l.b16 %v741
        %v845 = vunpack.c.l.b16 %v742
        %v846 = vunpack.c.l.b16 %v743
        %v847 = vunpack.c.l.b16 %v744
        %v848 = vunpack.c.l.b16 %v745
        %v849 = vunpack.c.l.b16 %v746
        %v850 = vunpack.c.l.b16 %v747
        %v851 = vunpack.c.l.b16 %v748
        %v852 = vunpack.c.l.b16 %v749
        %v853 = vunpack.c.l.b16 %v750
        %v854 = vunpack.c.l.b16 %v751
        %v855 = vunpack.c.l.b16 %v752
        %v856 = vunpack.c.l.b16 %v753
        %v857 = vunpack.c.l.b16 %v754
        %v858 = vunpack.c.l.b16 %v755
        %v859 = vunpack.c.l.b16 %v756
        %v860 = vunpack.c.l.b16 %v757
        %v861 = vunpack.c.l.b16 %v758
        %v862 = vunpack.c.l.b16 %v759
        %v863 = vpack.c.b16 %v816, %v815
        %v864 = vpack.c.b16 %v818, %v817
        %v865 = vpack.c.b16 %v820, %v819
        %v866 = vpack.c.b16 %v822, %v821
        %v867 = vpack.c.b16 %v824, %v823
        %v868 = vpack.c.b16 %v826, %v825
        %v869 = vpack.c.b16 %v828, %v827
        %v870 = vpack.c.b16 %v830, %v829
        %v871 = vpack.c.b16 %v832, %v831
        %v872 = vpack.c.b16 %v834, %v833
        %v873 = vpack.c.b16 %v836, %v835
        %v874 = vpack.c.b16 %v838, %v837
        %v875 = vpack.c.b16 %v840, %v839
        %v876 = vpack.c.b16 %v842, %v841
        %v877 = vpack.c.b16 %v844, %v843
        %v878 = vpack.c.b16 %v846, %v845
        %v879 = vpack.c.b16 %v848, %v847
        %v880 = vpack.c.b16 %v850, %v849
        %v881 = vpack.c.b16 %v852, %v851
        %v882 = vpack.c.b16 %v854, %v853
        %v883 = vpack.c.b16 %v856, %v855
        %v884 = vpack.c.b16 %v858, %v857
        %v885 = vpack.c.b16 %v860, %v859
        %v886 = vpack.c.b16 %v862, %v861
        %911 = vmatprep.subr.bf16.mxu0 0
        %912 = vmatpush1.bf16.msra.mxu0 %v863
        %913 = vmatprep.subr.bf16.mxu0 0
        %914 = vmatpush1.bf16.msra.mxu0 %v864
        %915 = vmatprep.subr.bf16.mxu0 0
        %916 = vmatpush1.bf16.msra.mxu0 %v865
        %917 = vmatprep.subr.bf16.mxu0 0
        %918 = vmatpush1.bf16.msra.mxu0 %v866
        %919 = vmatprep.subr.bf16.mxu0 0
        %920 = vmatpush1.bf16.msra.mxu0 %v867
        %921 = vmatprep.subr.bf16.mxu0 0
        %922 = vmatpush1.bf16.msra.mxu0 %v868
        %923 = vmatprep.subr.bf16.mxu0 0
        %924 = vmatpush1.bf16.msra.mxu0 %v869
        %925 = vmatprep.subr.bf16.mxu0 0
        %926 = vmatpush1.bf16.msra.mxu0 %v870
        %927 = vmatprep.subr.bf16.mxu0 0
        %928 = vmatpush1.bf16.msra.mxu0 %v871
        %929 = vmatprep.subr.bf16.mxu0 0
        %930 = vmatpush1.bf16.msra.mxu0 %v872
        %931 = vmatprep.subr.bf16.mxu0 0
        %932 = vmatpush1.bf16.msra.mxu0 %v873
        %933 = vmatprep.subr.bf16.mxu0 0
        %934 = vmatpush1.bf16.msra.mxu0 %v874
        %935 = vmatprep.subr.bf16.mxu0 0
        %936 = vmatpush1.bf16.msra.mxu0 %v875
        %937 = vmatprep.subr.bf16.mxu0 0
        %938 = vmatpush1.bf16.msra.mxu0 %v876
        %939 = vmatprep.subr.bf16.mxu0 0
        %940 = vmatpush1.bf16.msra.mxu0 %v877
        %941 = vmatprep.subr.bf16.mxu0 0
        %942 = vmatpush1.bf16.msra.mxu0 %v878
        %943 = vmatprep.mubr.bf16.mxu0 %v710
        %944 = vmatmul.mubr.bf16.gmra.mrb[0].mxu0 %v709
        %v945 = vpop.f32.mrb[0].mxu0
        %v946 = vadd.f32 %v765, %v945
        %v947 = vpop.f32.mrb[0].mxu0
        %v948 = vpop.f32.mrb[0].mxu0
        %v949 = vadd.f32 %v765, %v948
        %v950 = vpop.f32.mrb[0].mxu0
        %951 = vdwg.mxu0
        %952 = vmatprep.subr.bf16.mxu0 0
        %953 = vmatpush1.bf16.msra.mxu0 %v879
        %954 = vmatprep.subr.bf16.mxu0 0
        %955 = vmatpush1.bf16.msra.mxu0 %v880
        %956 = vmatprep.subr.bf16.mxu0 0
        %957 = vmatpush1.bf16.msra.mxu0 %v881
        %958 = vmatprep.subr.bf16.mxu0 0
        %959 = vmatpush1.bf16.msra.mxu0 %v882
        %960 = vmatprep.subr.bf16.mxu0 0
        %961 = vmatpush1.bf16.msra.mxu0 %v883
        %962 = vmatprep.subr.bf16.mxu0 0
        %963 = vmatpush1.bf16.msra.mxu0 %v884
        %964 = vmatprep.subr.bf16.mxu0 0
        %965 = vmatpush1.bf16.msra.mxu0 %v885
        %966 = vmatprep.subr.bf16.mxu0 0
        %967 = vmatpush1.bf16.msra.mxu0 %v886
        %968 = vmatprep.subr.bf16.mxu0 0
        %969 = vmatpush1.bf16.msra.mxu0 0
        %970 = vmatprep.subr.bf16.mxu0 0
        %971 = vmatpush1.bf16.msra.mxu0 0
        %972 = vmatprep.subr.bf16.mxu0 0
        %973 = vmatpush1.bf16.msra.mxu0 0
        %974 = vmatprep.subr.bf16.mxu0 0
        %975 = vmatpush1.bf16.msra.mxu0 0
        %976 = vmatprep.subr.bf16.mxu0 0
        %977 = vmatpush1.bf16.msra.mxu0 0
        %978 = vmatprep.subr.bf16.mxu0 0
        %979 = vmatpush1.bf16.msra.mxu0 0
        %980 = vmatprep.subr.bf16.mxu0 0
        %981 = vmatpush1.bf16.msra.mxu0 0
        %982 = vmatprep.subr.bf16.mxu0 0
        %983 = vmatpush1.bf16.msra.mxu0 0
        %984 = vmatprep.mubr.bf16.mxu0 0
        %985 = vmatmul.mubr.bf16.gmra.mrb[0].mxu0 %v711
        %v986 = vpop.f32.mrb[0].mxu0
        %v987 = vadd.f32 %v946, %v986
        %v988 = vpop.f32.mrb[0].mxu0
        %v989 = vpop.f32.mrb[0].mxu0
        %v990 = vadd.f32 %v949, %v989
        %v991 = vpop.f32.mrb[0].mxu0
        %992 = vdwg.mxu0
        %v993 = vmax.f32 %v987, 0.0
        %v994 = vmax.f32 %v990, 0.0
        %v995 = vpack.c.bf16 %v994, %v993
        %v996 = vld [vmem:[#allocation9] sm:$0xff]
        %v997 = vld [vmem:[#allocation9 + $0x8] sm:$0xff]
        %v998 = vld [vmem:[#allocation9 + $0x10] sm:$0xff]
        %v999 = vld [vmem:[#allocation9 + $0x18] sm:$0xff]
        %v1000 = vld [vmem:[#allocation9 + $0x20] sm:$0xff]
        %v1001 = vld [vmem:[#allocation9 + $0x28] sm:$0xff]
        %v1002 = vld [vmem:[#allocation9 + $0x30] sm:$0xff]
        %v1003 = vld [vmem:[#allocation9 + $0x38] sm:$0xff]
        %v1004 = vld [vmem:[#allocation9 + $0x40] sm:$0xff]
        %v1005 = vld [vmem:[#allocation9 + $0x48] sm:$0xff]
        %v1006 = vld [vmem:[#allocation9 + $0x50] sm:$0xff]
        %v1007 = vld [vmem:[#allocation9 + $0x58] sm:$0xff]
        %v1008 = vld [vmem:[#allocation9 + $0x60] sm:$0xff]
        %v1009 = vld [vmem:[#allocation9 + $0x68] sm:$0xff]
        %v1010 = vld [vmem:[#allocation9 + $0x70] sm:$0xff]
        %v1011 = vld [vmem:[#allocation9 + $0x78] sm:$0xff]
        %v1012 = vld [vmem:[#allocation9 + $0x80] sm:$0xff]
        %v1013 = vld [vmem:[#allocation9 + $0x88] sm:$0xff]
        %v1014 = vld [vmem:[#allocation9 + $0x90] sm:$0xff]
        %v1015 = vld [vmem:[#allocation9 + $0x98] sm:$0xff]
        %v1016 = vld [vmem:[#allocation9 + $0xa0] sm:$0xff]
        %v1017 = vld [vmem:[#allocation9 + $0xa8] sm:$0xff]
        %v1018 = vld [vmem:[#allocation9 + $0xb0] sm:$0xff]
        %v1019 = vld [vmem:[#allocation9 + $0xb8] sm:$0xff]
        %v1020 = vld [vmem:[#allocation9 + $0xc0] sm:$0xff]
        %v1021 = vld [vmem:[#allocation9 + $0xc8] sm:$0xff]
        %v1022 = vld [vmem:[#allocation9 + $0xd0] sm:$0xff]
        %v1023 = vld [vmem:[#allocation9 + $0xd8] sm:$0xff]
        %v1024 = vld [vmem:[#allocation9 + $0xe0] sm:$0xff]
        %v1025 = vld [vmem:[#allocation9 + $0xe8] sm:$0xff]
        %v1026 = vld [vmem:[#allocation9 + $0xf0] sm:$0xff]
        %v1027 = vld [vmem:[#allocation9 + $0xf8] sm:$0xff]
        %v1028 = vld [vmem:[%s6] sm:$0xf]
        %v1030 = vlaneseq
        %v1031 = vshrl.u32 %v1030, 7
        %v1032 = vsub.s32 0, %v1031
        %v1033 = vrot.slane %v1028, %v1032
        %v1034 = vlaneseq
        %v1035 = vshrl.u32 %v1034, 7
        %v1036 = vsub.s32 1, %v1035
        %v1037 = vrot.slane %v1028, %v1036
        %v1038 = vlaneseq
        %v1039 = vshrl.u32 %v1038, 7
        %v1040 = vsub.s32 2, %v1039
        %v1041 = vrot.slane %v1028, %v1040
        %v1042 = vlaneseq
        %v1043 = vshrl.u32 %v1042, 7
        %v1044 = vsub.s32 3, %v1043
        %v1045 = vrot.slane %v1028, %v1044
        %v1082 = vunpack.c.l.b16 %v996
        %v1083 = vunpack.c.h.b16 %v996
        %v1084 = vunpack.c.l.b16 %v997
        %v1085 = vunpack.c.h.b16 %v997
        %v1086 = vunpack.c.l.b16 %v998
        %v1087 = vunpack.c.h.b16 %v998
        %v1088 = vunpack.c.l.b16 %v999
        %v1089 = vunpack.c.h.b16 %v999
        %v1090 = vunpack.c.l.b16 %v1000
        %v1091 = vunpack.c.h.b16 %v1000
        %v1092 = vunpack.c.l.b16 %v1001
        %v1093 = vunpack.c.h.b16 %v1001
        %v1094 = vunpack.c.l.b16 %v1002
        %v1095 = vunpack.c.h.b16 %v1002
        %v1096 = vunpack.c.l.b16 %v1003
        %v1097 = vunpack.c.h.b16 %v1003
        %v1098 = vunpack.c.l.b16 %v1004
        %v1099 = vunpack.c.h.b16 %v1004
        %v1100 = vunpack.c.l.b16 %v1005
        %v1101 = vunpack.c.h.b16 %v1005
        %v1102 = vunpack.c.l.b16 %v1006
        %v1103 = vunpack.c.h.b16 %v1006
        %v1104 = vunpack.c.l.b16 %v1007
        %v1105 = vunpack.c.h.b16 %v1007
        %v1106 = vunpack.c.l.b16 %v1008
        %v1107 = vunpack.c.h.b16 %v1008
        %v1108 = vunpack.c.l.b16 %v1009
        %v1109 = vunpack.c.h.b16 %v1009
        %v1110 = vunpack.c.l.b16 %v1010
        %v1111 = vunpack.c.h.b16 %v1010
        %v1112 = vunpack.c.l.b16 %v1011
        %v1113 = vunpack.c.h.b16 %v1011
        %v1114 = vunpack.c.l.b16 %v1012
        %v1115 = vunpack.c.h.b16 %v1012
        %v1116 = vunpack.c.l.b16 %v1013
        %v1117 = vunpack.c.h.b16 %v1013
        %v1118 = vunpack.c.l.b16 %v1014
        %v1119 = vunpack.c.h.b16 %v1014
        %v1120 = vunpack.c.l.b16 %v1015
        %v1121 = vunpack.c.h.b16 %v1015
        %v1122 = vunpack.c.l.b16 %v1016
        %v1123 = vunpack.c.h.b16 %v1016
        %v1124 = vunpack.c.l.b16 %v1017
        %v1125 = vunpack.c.h.b16 %v1017
        %v1126 = vunpack.c.l.b16 %v1018
        %v1127 = vunpack.c.h.b16 %v1018
        %v1128 = vunpack.c.l.b16 %v1019
        %v1129 = vunpack.c.h.b16 %v1019
        %v1130 = vunpack.c.l.b16 %v1020
        %v1131 = vunpack.c.h.b16 %v1020
        %v1132 = vunpack.c.l.b16 %v1021
        %v1133 = vunpack.c.h.b16 %v1021
        %v1134 = vunpack.c.l.b16 %v1022
        %v1135 = vunpack.c.h.b16 %v1022
        %v1136 = vunpack.c.l.b16 %v1023
        %v1137 = vunpack.c.h.b16 %v1023
        %v1138 = vunpack.c.l.b16 %v1024
        %v1139 = vunpack.c.h.b16 %v1024
        %v1140 = vunpack.c.l.b16 %v1025
        %v1141 = vunpack.c.h.b16 %v1025
        %v1142 = vunpack.c.l.b16 %v1026
        %v1143 = vunpack.c.h.b16 %v1026
        %v1144 = vunpack.c.l.b16 %v1027
        %v1145 = vunpack.c.h.b16 %v1027
        %v1146 = vpack.c.b16 %v1086, %v1082
        %v1147 = vpack.c.b16 %v1087, %v1083
        %v1148 = vpack.c.b16 %v1088, %v1084
        %v1149 = vpack.c.b16 %v1089, %v1085
        %v1150 = vpack.c.b16 %v1094, %v1090
        %v1151 = vpack.c.b16 %v1095, %v1091
        %v1152 = vpack.c.b16 %v1096, %v1092
        %v1153 = vpack.c.b16 %v1097, %v1093
        %v1154 = vpack.c.b16 %v1102, %v1098
        %v1155 = vpack.c.b16 %v1103, %v1099
        %v1156 = vpack.c.b16 %v1104, %v1100
        %v1157 = vpack.c.b16 %v1105, %v1101
        %v1158 = vpack.c.b16 %v1110, %v1106
        %v1159 = vpack.c.b16 %v1111, %v1107
        %v1160 = vpack.c.b16 %v1112, %v1108
        %v1161 = vpack.c.b16 %v1113, %v1109
        %v1162 = vpack.c.b16 %v1118, %v1114
        %v1163 = vpack.c.b16 %v1119, %v1115
        %v1164 = vpack.c.b16 %v1120, %v1116
        %v1165 = vpack.c.b16 %v1121, %v1117
        %v1166 = vpack.c.b16 %v1126, %v1122
        %v1167 = vpack.c.b16 %v1127, %v1123
        %v1168 = vpack.c.b16 %v1128, %v1124
        %v1169 = vpack.c.b16 %v1129, %v1125
        %v1170 = vpack.c.b16 %v1134, %v1130
        %v1171 = vpack.c.b16 %v1135, %v1131
        %v1172 = vpack.c.b16 %v1136, %v1132
        %v1173 = vpack.c.b16 %v1137, %v1133
        %v1174 = vpack.c.b16 %v1142, %v1138
        %v1175 = vpack.c.b16 %v1143, %v1139
        %v1176 = vpack.c.b16 %v1144, %v1140
        %v1177 = vpack.c.b16 %v1145, %v1141
        %1210 = vmatprep.subr.bf16.mxu0 %v1147
        %1211 = vmatpush1.bf16.msra.mxu0 %v1146
        %1212 = vmatprep.subr.bf16.mxu0 %v1151
        %1213 = vmatpush1.bf16.msra.mxu0 %v1150
        %1214 = vmatprep.subr.bf16.mxu0 %v1155
        %1215 = vmatpush1.bf16.msra.mxu0 %v1154
        %1216 = vmatprep.subr.bf16.mxu0 %v1159
        %1217 = vmatpush1.bf16.msra.mxu0 %v1158
        %1218 = vmatprep.subr.bf16.mxu0 %v1163
        %1219 = vmatpush1.bf16.msra.mxu0 %v1162
        %1220 = vmatprep.subr.bf16.mxu0 %v1167
        %1221 = vmatpush1.bf16.msra.mxu0 %v1166
        %1222 = vmatprep.subr.bf16.mxu0 %v1171
        %1223 = vmatpush1.bf16.msra.mxu0 %v1170
        %1224 = vmatprep.subr.bf16.mxu0 %v1175
        %1225 = vmatpush1.bf16.msra.mxu0 %v1174
        %1226 = vmatprep.subr.bf16.mxu0 0
        %1227 = vmatpush1.bf16.msra.mxu0 0
        %1228 = vmatprep.subr.bf16.mxu0 0
        %1229 = vmatpush1.bf16.msra.mxu0 0
        %1230 = vmatprep.subr.bf16.mxu0 0
        %1231 = vmatpush1.bf16.msra.mxu0 0
        %1232 = vmatprep.subr.bf16.mxu0 0
        %1233 = vmatpush1.bf16.msra.mxu0 0
        %1234 = vmatprep.subr.bf16.mxu0 0
        %1235 = vmatpush1.bf16.msra.mxu0 0
        %1236 = vmatprep.subr.bf16.mxu0 0
        %1237 = vmatpush1.bf16.msra.mxu0 0
        %1238 = vmatprep.subr.bf16.mxu0 0
        %1239 = vmatpush1.bf16.msra.mxu0 0
        %1240 = vmatprep.subr.bf16.mxu0 0
        %1241 = vmatpush1.bf16.msra.mxu0 0
        %1242 = vmatprep.mubr.bf16.mxu0 0
        %1243 = vmatmul.mubr.bf16.gmra.mrb[0].mxu0 %v995
        %v1244 = vpop.f32.mrb[0].mxu0
        %v1245 = vadd.f32 %v1033, %v1244
        %v1246 = vpop.f32.mrb[0].mxu0
        %v1247 = vadd.f32 %v1037, %v1246
        %v1248 = vpop.f32.mrb[0].mxu0
        %v1249 = vadd.f32 %v1033, %v1248
        %v1250 = vpop.f32.mrb[0].mxu0
        %v1251 = vadd.f32 %v1037, %v1250
        %1252 = vdwg.mxu0
        %1253 = vmatprep.subr.bf16.mxu0 %v1149
        %1254 = vmatpush1.bf16.msra.mxu0 %v1148
        %1255 = vmatprep.subr.bf16.mxu0 %v1153
        %1256 = vmatpush1.bf16.msra.mxu0 %v1152
        %1257 = vmatprep.subr.bf16.mxu0 %v1157
        %1258 = vmatpush1.bf16.msra.mxu0 %v1156
        %1259 = vmatprep.subr.bf16.mxu0 %v1161
        %1260 = vmatpush1.bf16.msra.mxu0 %v1160
        %1261 = vmatprep.subr.bf16.mxu0 %v1165
        %1262 = vmatpush1.bf16.msra.mxu0 %v1164
        %1263 = vmatprep.subr.bf16.mxu0 %v1169
        %1264 = vmatpush1.bf16.msra.mxu0 %v1168
        %1265 = vmatprep.subr.bf16.mxu0 %v1173
        %1266 = vmatpush1.bf16.msra.mxu0 %v1172
        %1267 = vmatprep.subr.bf16.mxu0 %v1177
        %1268 = vmatpush1.bf16.msra.mxu0 %v1176
        %1269 = vmatprep.subr.bf16.mxu0 0
        %1270 = vmatpush1.bf16.msra.mxu0 0
        %1271 = vmatprep.subr.bf16.mxu0 0
        %1272 = vmatpush1.bf16.msra.mxu0 0
        %1273 = vmatprep.subr.bf16.mxu0 0
        %1274 = vmatpush1.bf16.msra.mxu0 0
        %1275 = vmatprep.subr.bf16.mxu0 0
        %1276 = vmatpush1.bf16.msra.mxu0 0
        %1277 = vmatprep.subr.bf16.mxu0 0
        %1278 = vmatpush1.bf16.msra.mxu0 0
        %1279 = vmatprep.subr.bf16.mxu0 0
        %1280 = vmatpush1.bf16.msra.mxu0 0
        %1281 = vmatprep.subr.bf16.mxu0 0
        %1282 = vmatpush1.bf16.msra.mxu0 0
        %1283 = vmatprep.subr.bf16.mxu0 0
        %1284 = vmatpush1.bf16.msra.mxu0 0
        %1285 = vmatprep.mubr.bf16.mxu0 0
        %1286 = vmatmul.mubr.bf16.gmra.mrb[0].mxu0 %v995
        %v1287 = vpop.f32.mrb[0].mxu0
        %v1288 = vadd.f32 %v1041, %v1287
        %v1289 = vpop.f32.mrb[0].mxu0
        %v1290 = vadd.f32 %v1045, %v1289
        %v1291 = vpop.f32.mrb[0].mxu0
        %v1292 = vadd.f32 %v1041, %v1291
        %v1293 = vpop.f32.mrb[0].mxu0
        %v1294 = vadd.f32 %v1045, %v1293
        %1295 = vdwg.mxu0
        %v1296 = vadd.f32 %v1245, %v342
        %v1297 = vadd.f32 %v1247, %v343
        %v1298 = vadd.f32 %v1288, %v344
        %v1299 = vadd.f32 %v1290, %v345
        %v1300 = vadd.f32 %v1249, %v346
        %v1301 = vadd.f32 %v1251, %v347
        %v1302 = vadd.f32 %v1292, %v348
        %v1303 = vadd.f32 %v1294, %v349
        %v1304 = vmax.f32 %v1296, 0.0
        %v1305 = vmax.f32 %v1297, 0.0
        %v1306 = vmax.f32 %v1298, 0.0
        %v1307 = vmax.f32 %v1299, 0.0
        %v1308 = vmax.f32 %v1300, 0.0
        %v1309 = vmax.f32 %v1301, 0.0
        %v1310 = vmax.f32 %v1302, 0.0
        %v1311 = vmax.f32 %v1303, 0.0
        %1312 = vst [vmem:[%s340] sm:$0xff] %v1304
        %1313 = vst [vmem:[%s340 + $0x8] sm:$0xff] %v1305
        %1314 = vst [vmem:[%s340 + $0x10] sm:$0xff] %v1306
        %1315 = vst [vmem:[%s340 + $0x18] sm:$0xff] %v1307
        %1316 = vst [vmem:[%s340 + $0x20] sm:$0xff] %v1308
        %1317 = vst [vmem:[%s340 + $0x28] sm:$0xff] %v1309
        %1318 = vst [vmem:[%s340 + $0x30] sm:$0xff] %v1310
        %1319 = vst [vmem:[%s340 + $0x38] sm:$0xff] %v1311
        %s1320 = sand.u32 %s186, 1
        %s1321 = scalar_lea.sflag [#allocation5], %s1320
        %s1322 = sand.u32 %s186, 1
        %s1323 = smul.addr %s1322, 64
        %s1324 = scalar_lea.vmem [#allocation11], %s1323
        // Predicated region
        $region65: #{tpu_custom_call.1} parent=47 // pred_check
          %p1325 = pneg %p196
        $region66: #{tpu_custom_call.1} parent=47 // pred_check_branch
          %1327 = sbr.rel (%p1325) target = $region68
        $region67: #{tpu_custom_call.1} parent=47 // pred_region
          %s1329 = ssub.s32 1024, 1024
          %1330 = vsyncadd %s1321, %s1329
          %s1331 = smul.addr %s26, 8
          %s1332 = smul.addr %s1331, 128
          %s1333 = scalar_lea.hbm %s7, %s1332
          %s1334 = sshll.u32 %s1324, 4
          %s1335 = int_to_ptr.vmem [resolvable:$true] %s1334
          %1340 = dma.vmem_to_hbm [thread:$0]  %s1335, 1024, %s1333, %s1321, 512, 512, 32
        $region68: #{tpu_custom_call.1} parent=47 // pred_fallthru
          _
      $region48: #{tpu_custom_call.1} parent=5 // pred_fallthru
        _
      %p1341 = scmp.le.s32.totalorder 2, %s21
      // Predicated region
      $region69: #{tpu_custom_call.1} parent=5 // pred_check
        %p1342 = pneg %p1341
      $region70: #{tpu_custom_call.1} parent=5 // pred_check_branch
        %1344 = sbr.rel (%p1342) target = $region72
      $region71: #{tpu_custom_call.1} parent=5 // pred_region
        %s1345 = ssub.s32 %s21, 2
        // Predicated region
        $region73: #{tpu_custom_call.1} parent=71 // pred_check
          %p1346 = pneg %p202
        $region74: #{tpu_custom_call.1} parent=71 // pred_check_branch
          %1348 = sbr.rel (%p1346) target = $region76
        $region75: #{tpu_custom_call.1} parent=71 // pred_region
          %s1349 = sand.u32 %s187, 1
          %s1350 = scalar_lea.sflag [#allocation5], %s1349
          %s1351 = sand.u32 %s187, 1
          %s1352 = smul.addr %s1351, 64
          %s1353 = scalar_lea.vmem [#allocation11], %s1352
          %1354 = dma.done %s1350, 1024
        $region76: #{tpu_custom_call.1} parent=71 // pred_fallthru
          _
      $region72: #{tpu_custom_call.1} parent=5 // pred_fallthru
        _
    $region6: #{tpu_custom_call.1} parent=1 // loop_footer
      %s25 = sadd.s32 1, %s21
    $region7: #{tpu_custom_call.1} parent=1 // loop_footer_branch
      %20 = sbr.rel target = $region3
    $region8: #{tpu_custom_call.1} parent=1 // loop_exit
      _
    %1355 = vsyncpa [#allocation4], 1
    %s1356 = scalar_lea.sflag [#allocation4], 1
    %1357 = vsyncpa %s1356, 1
    %1358 = vsyncpa [#allocation7], 1
    %1359 = vsyncpa [#allocation10], 1
    %1360 = vsyncpa [#allocation5], 1
    %s1361 = scalar_lea.sflag [#allocation5], 1
    %1362 = vsyncpa %s1361, 1

</llo_original>
